<compile_context>
chip_gen: v7x
topology: tpu7x:2x2x1
jax: 0.10.0
libtpu: 0.0.40
codegen_flags: <defaults>
</compile_context>

<pallas_src>
import jax
import jax.numpy as jnp
from jax.experimental import pallas as pl
from jax.experimental.pallas import tpu as pltpu


def _round_up(x, m):
    return ((x + m - 1) // m) * m


def _residual_kernel(x_ref, w_ref, b_ref, o_ref):
    # x_ref: (TM, D) f32 | w_ref: (D, D) bf16 (VMEM-resident across grid)
    # b_ref: (1, D) f32  | o_ref: (TM, D)
    x = x_ref[...]
    # fn(x) = x @ W + b : bf16 MXU operands, f32 accumulation.
    fn_out = jnp.dot(
        x.astype(jnp.bfloat16), w_ref[...], preferred_element_type=jnp.float32
    )
    # Bias + residual add in f32 on the VPU, single store (lane-dense, D%128==0).
    o_ref[...] = (fn_out + b_ref[...] + x).astype(o_ref.dtype)


def residual_forward(x, w, b, *, tile_m=512):
    """Residual semantics: fn(x) + x, with fn(x) = x @ W + b.

    x: (B, N, D) float32 ; w: (D, D) ; b: (D,).
    """
    # TODO(synk): the generic Residual wraps an arbitrary `fn`; only the
    # Linear instantiation of `fn` is fused here.
    B, N, D = x.shape
    M = B * N

    # Large row tile, clamped so tiny inputs are not padded up to a full
    # 512-row tile. Always a multiple of 8 (sublane alignment).
    tm = min(tile_m, _round_up(M, 8))
    tm = max(8, (tm // 8) * 8)
    M_pad = _round_up(M, tm)

    x2d = x.reshape(M, D)
    if M_pad != M:
        x2d = jnp.pad(x2d, ((0, M_pad - M), (0, 0)))

    # Weight resident in VMEM as bf16; bias resident as f32 (1, D).
    w_bf16 = w.astype(jnp.bfloat16)
    b2d = b.reshape(1, D).astype(jnp.float32)

    grid_m = M_pad // tm
    out = pl.pallas_call(
        _residual_kernel,
        out_shape=jax.ShapeDtypeStruct((M_pad, D), x.dtype),
        grid_spec=pltpu.PrefetchScalarGridSpec(
            num_scalar_prefetch=0,
            grid=(grid_m,),
            in_specs=[
                pl.BlockSpec((tm, D), lambda i: (i, 0)),  # x row tile
                pl.BlockSpec((D, D), lambda i: (0, 0)),   # W (resident, bf16)
                pl.BlockSpec((1, D), lambda i: (0, 0)),    # b (resident, f32)
            ],
            out_specs=pl.BlockSpec((tm, D), lambda i: (i, 0)),
        ),
        compiler_params=pltpu.CompilerParams(
            dimension_semantics=("parallel",),
        ),
        cost_estimate=pl.CostEstimate(
            flops=2 * M_pad * D * D,
            transcendentals=0,
            bytes_accessed=(M_pad * D * 4 * 2) + (D * D * 2) + (D * 4),
        ),
    )(x2d, w_bf16, b2d)

    if M_pad != M:
        out = out[:M]
    return out.reshape(B, N, D)


def _reference(x, w, b):
    """Pure-JAX reference with the same bf16-matmul / f32-accumulate recipe."""
    B, N, D = x.shape
    x2d = x.reshape(B * N, D)
    fn = jnp.dot(
        x2d.astype(jnp.bfloat16),
        w.astype(jnp.bfloat16),
        preferred_element_type=jnp.float32,
    )
    return (fn + b + x2d).reshape(B, N, D)


if __name__ == "__main__":
    key = jax.random.PRNGKey(0)
    kx, kw, kb = jax.random.split(key, 3)

    B, N, D = 2, 8, 128  # batch, seq, hidden (lane-dense D)
    x = jax.random.normal(kx, (B, N, D), dtype=jnp.float32)
    # Deterministic parameters for fn = Linear(D, D)
    w = jax.random.normal(kw, (D, D), dtype=jnp.float32) * (1.0 / jnp.sqrt(D))
    b = jax.random.normal(kb, (D,), dtype=jnp.float32) * 0.01

    out = residual_forward(x, w, b)
    jax.block_until_ready(out)
    ref = _reference(x, w, b)
    assert jnp.allclose(out, ref, atol=1e-3, rtol=1e-3), "mismatch vs reference"

    # Exercise the ragged-M (padded tail tile) path: M = 3*5 = 15 -> pad to 16.
    x2 = jax.random.normal(kx, (3, 5, D), dtype=jnp.float32)
    out2 = residual_forward(x2, w, b)
    jax.block_until_ready(out2)
    ref2 = _reference(x2, w, b)
    assert jnp.allclose(out2, ref2, atol=1e-3, rtol=1e-3), "mismatch (padded M)"

    print("KERNEL_OK")
</pallas_src>

<mosaic_0001>
module attributes {stable_mosaic.version = 11 : i64} {
  func.func @_residual_kernel(%arg0: i32, %arg1: memref<16x128xf32, #tpu.memory_space<vmem>>, %arg2: memref<128x128xbf16, #tpu.memory_space<vmem>>, %arg3: memref<1x128xf32, #tpu.memory_space<vmem>>, %arg4: memref<16x128xf32, #tpu.memory_space<vmem>>) attributes {dimension_semantics = [#tpu.dimension_semantics<parallel>], iteration_bounds = array<i64: 1>, scalar_prefetch = 0 : i64, scratch_operands = 0 : i64, tpu.core_type = #tpu.core_type<tc>, window_params = [{transform_indices = @transform_0, window_bounds = array<i64: 16, 128>}, {pipeline_mode = #tpu.pipeline_mode<synchronous>, transform_indices = @transform_1, window_bounds = array<i64: 128, 128>}, {pipeline_mode = #tpu.pipeline_mode<synchronous>, transform_indices = @transform_2, window_bounds = array<i64: 1, 128>}, {transform_indices = @transform_3, window_bounds = array<i64: 16, 128>}]} {
    %c0 = arith.constant 0 : index
    %c0_0 = arith.constant 0 : index
    %0 = vector.load %arg1[%c0, %c0_0] : memref<16x128xf32, #tpu.memory_space<vmem>>, vector<16x128xf32>
    %1 = arith.truncf %0 : vector<16x128xf32> to vector<16x128xbf16>
    %c0_1 = arith.constant 0 : index
    %c0_2 = arith.constant 0 : index
    %2 = vector.load %arg2[%c0_1, %c0_2] : memref<128x128xbf16, #tpu.memory_space<vmem>>, vector<128x128xbf16>
    %cst = arith.constant dense<0.000000e+00> : vector<16x128xf32>
    %3 = tpu.matmul %1, %2, %cst {dimension_numbers = #tpu.dot_dimension_numbers<[1], [0], [0], [1], [0, 0, 1, 1], [], []>} : vector<16x128xbf16>, vector<128x128xbf16>, vector<16x128xf32> -> vector<16x128xf32>
    %c0_3 = arith.constant 0 : index
    %c0_4 = arith.constant 0 : index
    %4 = vector.load %arg3[%c0_3, %c0_4] : memref<1x128xf32, #tpu.memory_space<vmem>>, vector<1x128xf32>
    %5 = vector.broadcast %4 : vector<1x128xf32> to vector<16x128xf32>
    %6 = arith.addf %3, %5 : vector<16x128xf32>
    %7 = arith.addf %6, %0 : vector<16x128xf32>
    %c0_5 = arith.constant 0 : index
    %c0_6 = arith.constant 0 : index
    %8 = vector.load %arg4[%c0_5, %c0_6] : memref<16x128xf32, #tpu.memory_space<vmem>>, vector<16x128xf32>
    tpu.vector_store %arg4[%c0_5, %c0_6], %7 {strides = array<i32>} : memref<16x128xf32, #tpu.memory_space<vmem>>, vector<16x128xf32>,
    return
  }
  func.func @transform_0(%arg0: i32) -> (i32, i32) {
    %c0_i32 = arith.constant 0 : i32
    %c0_i32_0 = arith.constant 0 : i32
    return %arg0, %c0_i32 : i32, i32
  }
  func.func @transform_1(%arg0: i32) -> (i32, i32) {
    %c0_i32 = arith.constant 0 : i32
    %c0_i32_0 = arith.constant 0 : i32
    %c0_i32_1 = arith.constant 0 : i32
    return %c0_i32, %c0_i32_0 : i32, i32
  }
  func.func @transform_2(%arg0: i32) -> (i32, i32) {
    %c0_i32 = arith.constant 0 : i32
    %c0_i32_0 = arith.constant 0 : i32
    %c0_i32_1 = arith.constant 0 : i32
    return %c0_i32, %c0_i32_0 : i32, i32
  }
  func.func @transform_3(%arg0: i32) -> (i32, i32) {
    %c0_i32 = arith.constant 0 : i32
    %c0_i32_0 = arith.constant 0 : i32
    return %arg0, %c0_i32 : i32, i32
  }
}

</mosaic_0001>

<llo_original>
// kernel: tpu_custom_call.1
$region0: #{tpu_custom_call.1}
  #allocation0 [shape = 'u32[]', space=smem, size = 0x4, offset = 0x4, fixed_abs, tag = 'smem constant byte address 0x4 - core index']
  #allocation1 [shape = 'u32[144,128]{1,0:T(1,128)}', space=vmem, size = 0x12000, scoped, tag = 'internal scratch']
  %s0 = inlined_call_operand.hbm [shape: f32[16,128], index: 0, kind: input, shape index: {}]
  %s1 = inlined_call_operand.hbm [shape: bf16[128,128], index: 1, kind: input, shape index: {}]
  %s2 = inlined_call_operand.vmem [shape: f32[1,128], index: 2, kind: input, shape index: {}]
  %s3 = inlined_call_operand.hbm [shape: f32[16,128], index: 3, kind: output, shape index: {}]
  %s4 = sld [smem:[#allocation0]]
  $region30: #{tpu_custom_call.1} parent=0
    _
  %s6 = ssub.s32 1, %s4
  %s7 = scalar_select 0, %s6, %s4
  $region1: #{tpu_custom_call.1} parent=0
    #allocation2 [shape = 'u8[8192]{0}', space=vmem, size = 0x2000, scoped, tag = 'input window, operand 0, single buffered']
    #allocation3 [shape = 's32[1]{0}', space=sflag, size = 0x4, scoped, tag = 'scoped memory for tpu_custom_call.1']
    #allocation4 [shape = 's32[1]{0}', space=sflag, size = 0x4, scoped, tag = 'scoped memory for tpu_custom_call.1']
    #allocation5 [shape = 'u8[32768]{0}', space=vmem, size = 0x8000, scoped, tag = 'input window, operand 1, single buffered']
    #allocation6 [shape = 's32[1]{0}', space=sflag, size = 0x4, scoped, tag = 'scoped memory for tpu_custom_call.1']
    #allocation7 [shape = 'u8[8192]{0}', space=vmem, size = 0x2000, scoped, tag = 'output window, operand 0, single buffered']
    %8 = vsyncpa [#allocation3], 0
    %9 = vsyncpa [#allocation6], 0
    %10 = vsyncpa [#allocation4], 0
    // Predicated region
    $region2: #{tpu_custom_call.1} parent=1 // pred_check
      _
    $region3: #{tpu_custom_call.1} parent=1 // pred_check_branch
      %12 = sbr.rel (0) target = $region5
    $region4: #{tpu_custom_call.1} parent=1 // pred_region
      %s14 = ssub.s32 256, 256
      %15 = vsyncadd [#allocation3], %s14
      %s16 = sshll.u32 [#allocation2], 4
      %s17 = int_to_ptr.vmem [resolvable:$true] %s16
      %22 = dma.hbm_to_vmem [thread:$0]  %s0, 256, %s17, [#allocation3], 128, 128, 8
    $region5: #{tpu_custom_call.1} parent=1 // pred_fallthru
      _
    // Predicated region
    $region6: #{tpu_custom_call.1} parent=1 // pred_check
      _
    $region7: #{tpu_custom_call.1} parent=1 // pred_check_branch
      %24 = sbr.rel (0) target = $region9
    $region8: #{tpu_custom_call.1} parent=1 // pred_region
      %s26 = ssub.s32 1024, 1024
      %27 = vsyncadd [#allocation6], %s26
      %s28 = sshll.u32 [#allocation5], 4
      %s29 = int_to_ptr.vmem [resolvable:$true] %s28
      %34 = dma.hbm_to_vmem [thread:$0]  %s1, 1024, %s29, [#allocation6], 64, 64, 4
    $region9: #{tpu_custom_call.1} parent=1 // pred_fallthru
      _
    // Predicated region
    $region10: #{tpu_custom_call.1} parent=1 // pred_check
      _
    $region11: #{tpu_custom_call.1} parent=1 // pred_check_branch
      %36 = sbr.rel (0) target = $region13
    $region12: #{tpu_custom_call.1} parent=1 // pred_region
      _
    $region13: #{tpu_custom_call.1} parent=1 // pred_fallthru
      _
    // Predicated region
    $region14: #{tpu_custom_call.1} parent=1 // pred_check
      _
    $region15: #{tpu_custom_call.1} parent=1 // pred_check_branch
      %38 = sbr.rel (0) target = $region17
    $region16: #{tpu_custom_call.1} parent=1 // pred_region
      %39 = dma.done [#allocation3], 256
    $region17: #{tpu_custom_call.1} parent=1 // pred_fallthru
      _
    // Predicated region
    $region18: #{tpu_custom_call.1} parent=1 // pred_check
      _
    $region19: #{tpu_custom_call.1} parent=1 // pred_check_branch
      %41 = sbr.rel (0) target = $region21
    $region20: #{tpu_custom_call.1} parent=1 // pred_region
      %42 = dma.done [#allocation6], 1024
    $region21: #{tpu_custom_call.1} parent=1 // pred_fallthru
      _
    %v44 = vld [vmem:[#allocation2] sm:$0xff]
    %v45 = vld [vmem:[#allocation2 + $0x8] sm:$0xff]
    %v46 = vpack.c.bf16 %v45, %v44
    %v47 = vld [vmem:[#allocation5] sm:$0xf]
    %v48 = vld [vmem:[#allocation5 + $0x4] sm:$0xf]
    %v49 = vld [vmem:[#allocation5 + $0x8] sm:$0xf]
    %v50 = vld [vmem:[#allocation5 + $0xc] sm:$0xf]
    %v51 = vld [vmem:[#allocation5 + $0x10] sm:$0xf]
    %v52 = vld [vmem:[#allocation5 + $0x14] sm:$0xf]
    %v53 = vld [vmem:[#allocation5 + $0x18] sm:$0xf]
    %v54 = vld [vmem:[#allocation5 + $0x1c] sm:$0xf]
    %v55 = vld [vmem:[#allocation5 + $0x20] sm:$0xf]
    %v56 = vld [vmem:[#allocation5 + $0x24] sm:$0xf]
    %v57 = vld [vmem:[#allocation5 + $0x28] sm:$0xf]
    %v58 = vld [vmem:[#allocation5 + $0x2c] sm:$0xf]
    %v59 = vld [vmem:[#allocation5 + $0x30] sm:$0xf]
    %v60 = vld [vmem:[#allocation5 + $0x34] sm:$0xf]
    %v61 = vld [vmem:[#allocation5 + $0x38] sm:$0xf]
    %v62 = vld [vmem:[#allocation5 + $0x3c] sm:$0xf]
    %v63 = vld [vmem:[%s2] sm:$0x1]
    %v65 = vlaneseq
    %v66 = vshrl.u32 %v65, 7
    %v67 = vsub.s32 0, %v66
    %v68 = vrot.slane %v63, %v67
    %v86 = vunpack.c.l.b16 %v47
    %v87 = vunpack.c.l.b16 %v48
    %v88 = vunpack.c.l.b16 %v49
    %v89 = vunpack.c.l.b16 %v50
    %v90 = vunpack.c.l.b16 %v51
    %v91 = vunpack.c.l.b16 %v52
    %v92 = vunpack.c.l.b16 %v53
    %v93 = vunpack.c.l.b16 %v54
    %v94 = vunpack.c.l.b16 %v55
    %v95 = vunpack.c.l.b16 %v56
    %v96 = vunpack.c.l.b16 %v57
    %v97 = vunpack.c.l.b16 %v58
    %v98 = vunpack.c.l.b16 %v59
    %v99 = vunpack.c.l.b16 %v60
    %v100 = vunpack.c.l.b16 %v61
    %v101 = vunpack.c.l.b16 %v62
    %v102 = vpack.c.b16 %v87, %v86
    %v103 = vpack.c.b16 %v89, %v88
    %v104 = vpack.c.b16 %v91, %v90
    %v105 = vpack.c.b16 %v93, %v92
    %v106 = vpack.c.b16 %v95, %v94
    %v107 = vpack.c.b16 %v97, %v96
    %v108 = vpack.c.b16 %v99, %v98
    %v109 = vpack.c.b16 %v101, %v100
    %118 = vmatprep.subr.bf16.mxu0 0
    %119 = vmatpush1.bf16.msra.mxu0 %v102
    %120 = vmatprep.subr.bf16.mxu0 0
    %121 = vmatpush1.bf16.msra.mxu0 %v103
    %122 = vmatprep.subr.bf16.mxu0 0
    %123 = vmatpush1.bf16.msra.mxu0 %v104
    %124 = vmatprep.subr.bf16.mxu0 0
    %125 = vmatpush1.bf16.msra.mxu0 %v105
    %126 = vmatprep.subr.bf16.mxu0 0
    %127 = vmatpush1.bf16.msra.mxu0 %v106
    %128 = vmatprep.subr.bf16.mxu0 0
    %129 = vmatpush1.bf16.msra.mxu0 %v107
    %130 = vmatprep.subr.bf16.mxu0 0
    %131 = vmatpush1.bf16.msra.mxu0 %v108
    %132 = vmatprep.subr.bf16.mxu0 0
    %133 = vmatpush1.bf16.msra.mxu0 %v109
    %134 = vmatprep.subr.bf16.mxu0 0
    %135 = vmatpush1.bf16.msra.mxu0 0
    %136 = vmatprep.subr.bf16.mxu0 0
    %137 = vmatpush1.bf16.msra.mxu0 0
    %138 = vmatprep.subr.bf16.mxu0 0
    %139 = vmatpush1.bf16.msra.mxu0 0
    %140 = vmatprep.subr.bf16.mxu0 0
    %141 = vmatpush1.bf16.msra.mxu0 0
    %142 = vmatprep.subr.bf16.mxu0 0
    %143 = vmatpush1.bf16.msra.mxu0 0
    %144 = vmatprep.subr.bf16.mxu0 0
    %145 = vmatpush1.bf16.msra.mxu0 0
    %146 = vmatprep.subr.bf16.mxu0 0
    %147 = vmatpush1.bf16.msra.mxu0 0
    %148 = vmatprep.subr.bf16.mxu0 0
    %149 = vmatpush1.bf16.msra.mxu0 0
    %150 = vmatprep.mubr.bf16.mxu0 0
    %151 = vmatmul.mubr.bf16.gmra.mrb[0].mxu0 %v46
    %v152 = vpop.f32.mrb[0].mxu0
    %v153 = vadd.f32 %v68, %v152
    %v154 = vpop.f32.mrb[0].mxu0
    %v155 = vpop.f32.mrb[0].mxu0
    %v156 = vadd.f32 %v68, %v155
    %v157 = vpop.f32.mrb[0].mxu0
    %158 = vdwg.mxu0
    %v159 = vadd.f32 %v153, %v44
    %v160 = vadd.f32 %v156, %v45
    %161 = vst [vmem:[#allocation7] sm:$0xff] %v159
    %162 = vst [vmem:[#allocation7 + $0x8] sm:$0xff] %v160
    // Predicated region
    $region22: #{tpu_custom_call.1} parent=1 // pred_check
      _
    $region23: #{tpu_custom_call.1} parent=1 // pred_check_branch
      %164 = sbr.rel (0) target = $region25
    $region24: #{tpu_custom_call.1} parent=1 // pred_region
      %s166 = ssub.s32 256, 256
      %167 = vsyncadd [#allocation4], %s166
      %s168 = sshll.u32 [#allocation7], 4
      %s169 = int_to_ptr.vmem [resolvable:$true] %s168
      %174 = dma.vmem_to_hbm [thread:$0]  %s169, 256, %s3, [#allocation4], 128, 128, 8
    $region25: #{tpu_custom_call.1} parent=1 // pred_fallthru
      _
    // Predicated region
    $region26: #{tpu_custom_call.1} parent=1 // pred_check
      _
    $region27: #{tpu_custom_call.1} parent=1 // pred_check_branch
      %176 = sbr.rel (0) target = $region29
    $region28: #{tpu_custom_call.1} parent=1 // pred_region
      %177 = dma.done [#allocation4], 256
    $region29: #{tpu_custom_call.1} parent=1 // pred_fallthru
      _
    %178 = vsyncpa [#allocation3], 1
    %179 = vsyncpa [#allocation6], 1
    %180 = vsyncpa [#allocation4], 1

</llo_original>
